<compile_context>
chip_gen: v7x
topology: tpu7x:2x2x1
jax: 0.10.0
libtpu: 0.0.40
codegen_flags: <defaults>
</compile_context>

<pallas_src>
import jax
import jax.numpy as jnp
from jax.experimental import pallas as pl
from jax.experimental.pallas import tpu as pltpu


def _round_up(x, m):
    return (x + m - 1) // m * m


def _vmem_budget_bytes():
    """~75% of physical VMEM (96 MiB on v5e/v6e, 48 MiB on v7x); capped at 100 MiB.

    Falls back to a v7x-safe 48 MiB if the hardware query is unavailable."""
    cap = 64 * 1024 * 1024
    try:
        info = pltpu.get_tpu_info()
        c = getattr(info, "vmem_capacity_bytes", None)
        if c:
            cap = int(c)
    except Exception:
        pass
    return min(cap * 3 // 4, 100 * 1024 * 1024)


def _samplenet_kernel(x_ref, w1_ref, b1_ref, w2_ref, b2_ref, o_ref):
    # Layer 1: x @ W1 on the MXU (f32 accumulate); bias add + sigmoid on VPU/EUP.
    h = jnp.dot(x_ref[...], w1_ref[...], preferred_element_type=jnp.float32)
    h = jax.nn.sigmoid(h + b1_ref[...])            # b1 is (1, n_neurons), broadcasts over rows
    # Layer 2: h @ W2 + b2 (f32 accumulate), cast only on the final store.
    out = jnp.dot(h, w2_ref[...], preferred_element_type=jnp.float32)
    o_ref[...] = (out + b2_ref[...]).astype(o_ref.dtype)


def samplenet_forward(x, w1, b1, w2, b2, n_generated_samples, output_dim,
                      *, tile_b=4096, out_dtype=jnp.float32):
    """Two-layer sample-generation MLP (SampleNet.forward) as a single Pallas kernel.

    x:  (B, input_dim) float32
    w1: (input_dim, n_neurons)                          b1: (n_neurons,)
    w2: (n_neurons, output_dim * n_generated_samples)   b2: (same as w2 cols,)
    Returns [samples] with samples of shape (B, n_generated_samples, output_dim).
    """
    B, input_dim = x.shape
    n_neurons = w1.shape[1]
    n_out = w2.shape[1]
    assert n_out == output_dim * n_generated_samples

    x = x.astype(jnp.float32)
    w1 = w1.astype(jnp.float32)
    w2 = w2.astype(jnp.float32)
    # Biases as (1, N) f32 so they broadcast over the batch tile (tiny copies).
    b1_2d = b1.reshape(1, n_neurons).astype(jnp.float32)
    b2_2d = b2.reshape(1, n_out).astype(jnp.float32)

    out_itemsize = jnp.dtype(out_dtype).itemsize
    vmem_budget = _vmem_budget_bytes()
    weights_bytes = 4 * (input_dim * n_neurons + n_neurons + n_neurons * n_out + n_out)

    # Advisory cost estimate consistent with what the kernel actually touches.
    cost = pl.CostEstimate(
        flops=2 * B * (input_dim * n_neurons + n_neurons * n_out),
        transcendentals=B * n_neurons,
        bytes_accessed=int(4 * B * input_dim + weights_bytes + out_itemsize * B * n_out),
    )

    # Whole-problem VMEM footprint (inputs + weights + intermediate h + output).
    whole_bytes = (4 * B * input_dim + weights_bytes
                   + 4 * B * n_neurons + out_itemsize * B * n_out)

    if B <= tile_b and whole_bytes <= vmem_budget // 2:
        # Grid-free: whole arrays live as single VMEM blocks — no grid loop,
        # no double buffering, no pipeline prologue/epilogue, unpadded lanes.
        vmem = pl.BlockSpec(memory_space=pltpu.MemorySpace.VMEM)
        out_flat = pl.pallas_call(
            _samplenet_kernel,
            out_shape=jax.ShapeDtypeStruct((B, n_out), out_dtype),
            in_specs=[vmem] * 5,
            out_specs=vmem,
            compiler_params=pltpu.CompilerParams(vmem_limit_bytes=vmem_budget),
            cost_estimate=cost,
        )(x, w1, b1_2d, w2, b2_2d)
    else:
        # Batch-tiled path: x and the output stream through VMEM in (tb, .) tiles;
        # weights/biases use a constant index_map so they stay resident across the
        # whole grid.  No batch padding and no column padding: Pallas clamps the
        # ragged final block (out-of-range rows are never stored), and every block's
        # last dim equals the full array dim so the (8,128) rule does not apply.
        tb = _round_up(min(tile_b, B), 8)

        def _tile_bytes(t):
            return (2 * 4 * t * input_dim            # x tile, double buffered
                    + 2 * out_itemsize * t * n_out   # out tile, double buffered
                    + 4 * t * n_neurons              # intermediate h
                    + 2 * weights_bytes)             # resident weights/biases (+ margin)

        while tb > 8 and _tile_bytes(tb) > vmem_budget:
            tb = max(8, _round_up(tb // 2, 8))

        grid = (pl.cdiv(B, tb),)
        out_flat = pl.pallas_call(
            _samplenet_kernel,
            out_shape=jax.ShapeDtypeStruct((B, n_out), out_dtype),
            grid=grid,
            in_specs=[
                pl.BlockSpec((tb, input_dim), lambda i: (i, 0)),         # x: tiled over batch
                pl.BlockSpec((input_dim, n_neurons), lambda i: (0, 0)),  # w1: resident
                pl.BlockSpec((1, n_neurons), lambda i: (0, 0)),          # b1: resident
                pl.BlockSpec((n_neurons, n_out), lambda i: (0, 0)),      # w2: resident
                pl.BlockSpec((1, n_out), lambda i: (0, 0)),              # b2: resident
            ],
            out_specs=pl.BlockSpec((tb, n_out), lambda i: (i, 0)),
            compiler_params=pltpu.CompilerParams(
                dimension_semantics=("parallel",),   # megacore sharding on v7x
                vmem_limit_bytes=vmem_budget,
            ),
            cost_estimate=cost,
        )(x, w1, b1_2d, w2, b2_2d)

    # Glue: same reshape as the PyTorch forward.
    samples = out_flat.reshape(-1, n_generated_samples, output_dim)
    return [samples]


if __name__ == "__main__":
    # Small shapes consistent with SampleNet (scaled down).
    input_dim = 4
    n_neurons = 32
    output_dim = 2
    n_generated_samples = 16
    n_out = output_dim * n_generated_samples

    key = jax.random.PRNGKey(0)
    k_x, k_w1, k_b1, k_w2, k_b2, k_xb = jax.random.split(key, 6)

    w1 = jax.random.normal(k_w1, (input_dim, n_neurons), dtype=jnp.float32) * 0.1
    b1 = jax.random.normal(k_b1, (n_neurons,), dtype=jnp.float32) * 0.1
    w2 = jax.random.normal(k_w2, (n_neurons, n_out), dtype=jnp.float32) * 0.1
    b2 = jax.random.normal(k_b2, (n_out,), dtype=jnp.float32) * 0.1

    def reference(xx):
        r = jax.nn.sigmoid(xx @ w1 + b1) @ w2 + b2
        return r.reshape(-1, n_generated_samples, output_dim)

    # ---- Case 1: tiny batch -> grid-free path ----
    batch = 8
    x = jax.random.normal(k_x, (batch, input_dim), dtype=jnp.float32)
    out = samplenet_forward(x, w1, b1, w2, b2, n_generated_samples, output_dim)
    samples = jax.block_until_ready(out[0])
    assert samples.shape == (batch, n_generated_samples, output_dim)
    assert jnp.allclose(samples, reference(x), atol=1e-5, rtol=1e-5)

    # ---- Case 2: batch-tiled path with a ragged final tile (600 = 256+256+88) ----
    big_batch = 600
    xb = jax.random.normal(k_xb, (big_batch, input_dim), dtype=jnp.float32)
    out_b = samplenet_forward(xb, w1, b1, w2, b2, n_generated_samples, output_dim,
                              tile_b=256)
    samples_b = jax.block_until_ready(out_b[0])
    assert samples_b.shape == (big_batch, n_generated_samples, output_dim)
    assert jnp.allclose(samples_b, reference(xb), atol=1e-5, rtol=1e-5)

    print("KERNEL_OK")
</pallas_src>

<mosaic_0001>
module attributes {stable_mosaic.version = 11 : i64} {
  func.func @_samplenet_kernel(%arg0: memref<8x4xf32, #tpu.memory_space<vmem>>, %arg1: memref<4x32xf32, #tpu.memory_space<vmem>>, %arg2: memref<1x32xf32, #tpu.memory_space<vmem>>, %arg3: memref<32x32xf32, #tpu.memory_space<vmem>>, %arg4: memref<1x32xf32, #tpu.memory_space<vmem>>, %arg5: memref<8x32xf32, #tpu.memory_space<vmem>>) attributes {dimension_semantics = [], scalar_prefetch = 0 : i64, scratch_operands = 0 : i64, tpu.core_type = #tpu.core_type<tc>} {
    %c0 = arith.constant 0 : index
    %c0_0 = arith.constant 0 : index
    %0 = vector.load %arg0[%c0, %c0_0] : memref<8x4xf32, #tpu.memory_space<vmem>>, vector<8x4xf32>
    %c0_1 = arith.constant 0 : index
    %c0_2 = arith.constant 0 : index
    %1 = vector.load %arg1[%c0_1, %c0_2] : memref<4x32xf32, #tpu.memory_space<vmem>>, vector<4x32xf32>
    %cst = arith.constant dense<0.000000e+00> : vector<8x32xf32>
    %2 = tpu.matmul %0, %1, %cst {dimension_numbers = #tpu.dot_dimension_numbers<[1], [0], [0], [1], [0, 0, 1, 1], [], []>} : vector<8x4xf32>, vector<4x32xf32>, vector<8x32xf32> -> vector<8x32xf32>
    %c0_3 = arith.constant 0 : index
    %c0_4 = arith.constant 0 : index
    %3 = vector.load %arg2[%c0_3, %c0_4] : memref<1x32xf32, #tpu.memory_space<vmem>>, vector<1x32xf32>
    %4 = vector.broadcast %3 : vector<1x32xf32> to vector<8x32xf32>
    %5 = arith.addf %2, %4 : vector<8x32xf32>
    %6 = arith.negf %5 : vector<8x32xf32>
    %7 = math.exp %6 : vector<8x32xf32>
    %cst_5 = arith.constant 1.000000e+00 : f32
    %8 = vector.broadcast %cst_5 : f32 to vector<8x32xf32>
    %9 = arith.addf %8, %7 : vector<8x32xf32>
    %10 = arith.divf %8, %9 : vector<8x32xf32>
    %c0_6 = arith.constant 0 : index
    %c0_7 = arith.constant 0 : index
    %11 = vector.load %arg3[%c0_6, %c0_7] : memref<32x32xf32, #tpu.memory_space<vmem>>, vector<32x32xf32>
    %cst_8 = arith.constant dense<0.000000e+00> : vector<8x32xf32>
    %12 = tpu.matmul %10, %11, %cst_8 {dimension_numbers = #tpu.dot_dimension_numbers<[1], [0], [0], [1], [0, 0, 1, 1], [], []>} : vector<8x32xf32>, vector<32x32xf32>, vector<8x32xf32> -> vector<8x32xf32>
    %c0_9 = arith.constant 0 : index
    %c0_10 = arith.constant 0 : index
    %13 = vector.load %arg4[%c0_9, %c0_10] : memref<1x32xf32, #tpu.memory_space<vmem>>, vector<1x32xf32>
    %14 = vector.broadcast %13 : vector<1x32xf32> to vector<8x32xf32>
    %15 = arith.addf %12, %14 : vector<8x32xf32>
    %c0_11 = arith.constant 0 : index
    %c0_12 = arith.constant 0 : index
    %16 = vector.load %arg5[%c0_11, %c0_12] : memref<8x32xf32, #tpu.memory_space<vmem>>, vector<8x32xf32>
    tpu.vector_store %arg5[%c0_11, %c0_12], %15 {strides = array<i32>} : memref<8x32xf32, #tpu.memory_space<vmem>>, vector<8x32xf32>,
    return
  }
}

</mosaic_0001>

<llo_original>
// kernel: tpu_custom_call.1
$region0: #{tpu_custom_call.1}
  #allocation0 [shape = 'u32[]', space=smem, size = 0x4, offset = 0x4, fixed_abs, tag = 'smem constant byte address 0x4 - core index']
  #allocation1 [shape = 'u32[144,128]{1,0:T(1,128)}', space=vmem, size = 0x12000, scoped, tag = 'internal scratch']
  %s0 = inlined_call_operand.vmem [shape: f32[8,4], index: 0, kind: input, shape index: {}]
  %s1 = inlined_call_operand.vmem [shape: f32[4,32], index: 1, kind: input, shape index: {}]
  %s2 = inlined_call_operand.vmem [shape: f32[1,32], index: 2, kind: input, shape index: {}]
  %s3 = inlined_call_operand.hbm [shape: f32[32,32], index: 3, kind: input, shape index: {}]
  %s4 = inlined_call_operand.vmem [shape: f32[1,32], index: 4, kind: input, shape index: {}]
  %s5 = inlined_call_operand.hbm [shape: f32[8,32], index: 5, kind: output, shape index: {}]
  %s6 = sld [smem:[#allocation0]]
  $region34: #{tpu_custom_call.1} parent=0
    _
  %s8 = ssub.s32 1, %s6
  %s9 = scalar_select 0, %s8, %s6
  $region1: #{tpu_custom_call.1} parent=0
    #allocation2 [shape = 'u8[16384]{0}', space=vmem, size = 0x4000, scoped, tag = 'input window, operand 3, single buffered']
    #allocation3 [shape = 's32[1]{0}', space=sflag, size = 0x4, scoped, tag = 'scoped memory for tpu_custom_call.1']
    #allocation4 [shape = 's32[1]{0}', space=sflag, size = 0x4, scoped, tag = 'scoped memory for tpu_custom_call.1']
    #allocation5 [shape = 'u8[4096]{0}', space=vmem, size = 0x1000, scoped, tag = 'output window, operand 0, single buffered']
    %10 = vsyncpa [#allocation3], 0
    %11 = vsyncpa [#allocation4], 0
    // Predicated region
    $region2: #{tpu_custom_call.1} parent=1 // pred_check
      _
    $region3: #{tpu_custom_call.1} parent=1 // pred_check_branch
      %13 = sbr.rel (0) target = $region5
    $region4: #{tpu_custom_call.1} parent=1 // pred_region
      _
    $region5: #{tpu_custom_call.1} parent=1 // pred_fallthru
      _
    // Predicated region
    $region6: #{tpu_custom_call.1} parent=1 // pred_check
      _
    $region7: #{tpu_custom_call.1} parent=1 // pred_check_branch
      %15 = sbr.rel (0) target = $region9
    $region8: #{tpu_custom_call.1} parent=1 // pred_region
      _
    $region9: #{tpu_custom_call.1} parent=1 // pred_fallthru
      _
    // Predicated region
    $region10: #{tpu_custom_call.1} parent=1 // pred_check
      _
    $region11: #{tpu_custom_call.1} parent=1 // pred_check_branch
      %17 = sbr.rel (0) target = $region13
    $region12: #{tpu_custom_call.1} parent=1 // pred_region
      _
    $region13: #{tpu_custom_call.1} parent=1 // pred_fallthru
      _
    // Predicated region
    $region14: #{tpu_custom_call.1} parent=1 // pred_check
      _
    $region15: #{tpu_custom_call.1} parent=1 // pred_check_branch
      %19 = sbr.rel (0) target = $region17
    $region16: #{tpu_custom_call.1} parent=1 // pred_region
      %s21 = ssub.s32 512, 512
      %22 = vsyncadd [#allocation3], %s21
      %s23 = sshll.u32 [#allocation2], 4
      %s24 = int_to_ptr.vmem [resolvable:$true] %s23
      %29 = dma.hbm_to_vmem [thread:$0]  %s3, 512, %s24, [#allocation3], 128, 128, 8
    $region17: #{tpu_custom_call.1} parent=1 // pred_fallthru
      _
    // Predicated region
    $region18: #{tpu_custom_call.1} parent=1 // pred_check
      _
    $region19: #{tpu_custom_call.1} parent=1 // pred_check_branch
      %31 = sbr.rel (0) target = $region21
    $region20: #{tpu_custom_call.1} parent=1 // pred_region
      _
    $region21: #{tpu_custom_call.1} parent=1 // pred_fallthru
      _
    // Predicated region
    $region22: #{tpu_custom_call.1} parent=1 // pred_check
      _
    $region23: #{tpu_custom_call.1} parent=1 // pred_check_branch
      %33 = sbr.rel (0) target = $region25
    $region24: #{tpu_custom_call.1} parent=1 // pred_region
      %34 = dma.done [#allocation3], 512
    $region25: #{tpu_custom_call.1} parent=1 // pred_fallthru
      _
    %v35 = vld [vmem:[%s0] sm:$0xff]
    %v36 = vld [vmem:[%s1] sm:$0xf]
    %v37 = vld [vmem:[%s2] sm:$0x1]
    %v39 = vlaneseq
    %v40 = vshrl.u32 %v39, 7
    %v41 = vsub.s32 0, %v40
    %v42 = vrot.slane %v37, %v41
    %vm44 = vcmask 31744
    %v46 = vsel %vm44, %v35, 0
    %vm48 = vcmask 1043456
    %v50 = vsel %vm48, %v36, 0
    %52 = vmatprep.subr.mxu0 0.0
    %53 = vmatpush1.msra.mxu0 %v50
    %54 = vmatprep.subr.mxu0 0.0
    %55 = vmatpush1.msra.mxu0 0.0
    %56 = vmatprep.subr.mxu0 0.0
    %57 = vmatpush1.msra.mxu0 0.0
    %58 = vmatprep.subr.mxu0 0.0
    %59 = vmatpush1.msra.mxu0 0.0
    %60 = vmatprep.subr.mxu0 0.0
    %61 = vmatpush1.msra.mxu0 0.0
    %62 = vmatprep.subr.mxu0 0.0
    %63 = vmatpush1.msra.mxu0 0.0
    %64 = vmatprep.subr.mxu0 0.0
    %65 = vmatpush1.msra.mxu0 0.0
    %66 = vmatprep.subr.mxu0 0.0
    %67 = vmatpush1.msra.mxu0 0.0
    %68 = vmatprep.subr.mxu0 0.0
    %69 = vmatpush1.msra.mxu0 0.0
    %70 = vmatprep.subr.mxu0 0.0
    %71 = vmatpush1.msra.mxu0 0.0
    %72 = vmatprep.subr.mxu0 0.0
    %73 = vmatpush1.msra.mxu0 0.0
    %74 = vmatprep.subr.mxu0 0.0
    %75 = vmatpush1.msra.mxu0 0.0
    %76 = vmatprep.subr.mxu0 0.0
    %77 = vmatpush1.msra.mxu0 0.0
    %78 = vmatprep.subr.mxu0 0.0
    %79 = vmatpush1.msra.mxu0 0.0
    %80 = vmatprep.subr.mxu0 0.0
    %81 = vmatpush1.msra.mxu0 0.0
    %82 = vmatprep.subr.mxu0 0.0
    %83 = vmatpush1.msra.mxu0 0.0
    %84 = vmatprep.subr.mxu0 0.0
    %85 = vmatpush1.msra.mxu0 0.0
    %86 = vmatprep.subr.mxu0 0.0
    %87 = vmatpush1.msra.mxu0 0.0
    %88 = vmatprep.subr.mxu0 0.0
    %89 = vmatpush1.msra.mxu0 0.0
    %90 = vmatprep.subr.mxu0 0.0
    %91 = vmatpush1.msra.mxu0 0.0
    %92 = vmatprep.subr.mxu0 0.0
    %93 = vmatpush1.msra.mxu0 0.0
    %94 = vmatprep.subr.mxu0 0.0
    %95 = vmatpush1.msra.mxu0 0.0
    %96 = vmatprep.subr.mxu0 0.0
    %97 = vmatpush1.msra.mxu0 0.0
    %98 = vmatprep.subr.mxu0 0.0
    %99 = vmatpush1.msra.mxu0 0.0
    %100 = vmatprep.subr.mxu0 0.0
    %101 = vmatpush1.msra.mxu0 0.0
    %102 = vmatprep.subr.mxu0 0.0
    %103 = vmatpush1.msra.mxu0 0.0
    %104 = vmatprep.subr.mxu0 0.0
    %105 = vmatpush1.msra.mxu0 0.0
    %106 = vmatprep.subr.mxu0 0.0
    %107 = vmatpush1.msra.mxu0 0.0
    %108 = vmatprep.subr.mxu0 0.0
    %109 = vmatpush1.msra.mxu0 0.0
    %110 = vmatprep.subr.mxu0 0.0
    %111 = vmatpush1.msra.mxu0 0.0
    %112 = vmatprep.subr.mxu0 0.0
    %113 = vmatpush1.msra.mxu0 0.0
    %114 = vmatprep.subr.mxu0 0.0
    %115 = vmatpush1.msra.mxu0 0.0
    %116 = vmatprep.mubr.f32.mxu0 0.0
    %117 = vmatmul.mubr.f32.gmra.mrb[0].mxu0 %v46
    %v118 = vpop.f32.mrb[0].mxu0
    %v119 = vadd.f32 %v42, %v118
    %v120 = vpop.f32.mrb[0].mxu0
    %121 = vdwg.mxu0
    %v122 = vxor.u32 %v119, 2147483648
    %v123 = vmul.f32 %v122, 1.442695
    %v124 = vpow.pop %v123
    %v125 = vadd.f32 %v124, 1.0
    %v126 = vrcp.pop %v125
    %v127 = vmul.f32 1.0, %v126
    %v128 = vld [vmem:[#allocation2] sm:$0xff]
    %v129 = vld [vmem:[#allocation2 + $0x8] sm:$0xff]
    %v130 = vld [vmem:[#allocation2 + $0x10] sm:$0xff]
    %v131 = vld [vmem:[#allocation2 + $0x18] sm:$0xff]
    %v132 = vld [vmem:[%s4] sm:$0x1]
    %v134 = vlaneseq
    %v135 = vshrl.u32 %v134, 7
    %v136 = vsub.s32 0, %v135
    %v137 = vrot.slane %v132, %v136
    %vm139 = vcmask 261120
    %v141 = vsel %vm139, %v127, 0
    %143 = vmatprep.subr.mxu0 0.0
    %144 = vmatpush1.msra.mxu0 %v128
    %145 = vmatprep.subr.mxu0 0.0
    %146 = vmatpush1.msra.mxu0 %v129
    %147 = vmatprep.subr.mxu0 0.0
    %148 = vmatpush1.msra.mxu0 %v130
    %149 = vmatprep.subr.mxu0 0.0
    %150 = vmatpush1.msra.mxu0 %v131
    %151 = vmatprep.subr.mxu0 0.0
    %152 = vmatpush1.msra.mxu0 0.0
    %153 = vmatprep.subr.mxu0 0.0
    %154 = vmatpush1.msra.mxu0 0.0
    %155 = vmatprep.subr.mxu0 0.0
    %156 = vmatpush1.msra.mxu0 0.0
    %157 = vmatprep.subr.mxu0 0.0
    %158 = vmatpush1.msra.mxu0 0.0
    %159 = vmatprep.subr.mxu0 0.0
    %160 = vmatpush1.msra.mxu0 0.0
    %161 = vmatprep.subr.mxu0 0.0
    %162 = vmatpush1.msra.mxu0 0.0
    %163 = vmatprep.subr.mxu0 0.0
    %164 = vmatpush1.msra.mxu0 0.0
    %165 = vmatprep.subr.mxu0 0.0
    %166 = vmatpush1.msra.mxu0 0.0
    %167 = vmatprep.subr.mxu0 0.0
    %168 = vmatpush1.msra.mxu0 0.0
    %169 = vmatprep.subr.mxu0 0.0
    %170 = vmatpush1.msra.mxu0 0.0
    %171 = vmatprep.subr.mxu0 0.0
    %172 = vmatpush1.msra.mxu0 0.0
    %173 = vmatprep.subr.mxu0 0.0
    %174 = vmatpush1.msra.mxu0 0.0
    %175 = vmatprep.subr.mxu0 0.0
    %176 = vmatpush1.msra.mxu0 0.0
    %177 = vmatprep.subr.mxu0 0.0
    %178 = vmatpush1.msra.mxu0 0.0
    %179 = vmatprep.subr.mxu0 0.0
    %180 = vmatpush1.msra.mxu0 0.0
    %181 = vmatprep.subr.mxu0 0.0
    %182 = vmatpush1.msra.mxu0 0.0
    %183 = vmatprep.subr.mxu0 0.0
    %184 = vmatpush1.msra.mxu0 0.0
    %185 = vmatprep.subr.mxu0 0.0
    %186 = vmatpush1.msra.mxu0 0.0
    %187 = vmatprep.subr.mxu0 0.0
    %188 = vmatpush1.msra.mxu0 0.0
    %189 = vmatprep.subr.mxu0 0.0
    %190 = vmatpush1.msra.mxu0 0.0
    %191 = vmatprep.subr.mxu0 0.0
    %192 = vmatpush1.msra.mxu0 0.0
    %193 = vmatprep.subr.mxu0 0.0
    %194 = vmatpush1.msra.mxu0 0.0
    %195 = vmatprep.subr.mxu0 0.0
    %196 = vmatpush1.msra.mxu0 0.0
    %197 = vmatprep.subr.mxu0 0.0
    %198 = vmatpush1.msra.mxu0 0.0
    %199 = vmatprep.subr.mxu0 0.0
    %200 = vmatpush1.msra.mxu0 0.0
    %201 = vmatprep.subr.mxu0 0.0
    %202 = vmatpush1.msra.mxu0 0.0
    %203 = vmatprep.subr.mxu0 0.0
    %204 = vmatpush1.msra.mxu0 0.0
    %205 = vmatprep.subr.mxu0 0.0
    %206 = vmatpush1.msra.mxu0 0.0
    %207 = vmatprep.mubr.f32.mxu0 0.0
    %208 = vmatmul.mubr.f32.gmra.mrb[0].mxu0 %v141
    %v209 = vpop.f32.mrb[0].mxu0
    %v210 = vadd.f32 %v137, %v209
    %v211 = vpop.f32.mrb[0].mxu0
    %212 = vdwg.mxu0
    %213 = vst.msk [vmem:[#allocation5] sm:$0xff] %vm139, %v210
    // Predicated region
    $region26: #{tpu_custom_call.1} parent=1 // pred_check
      _
    $region27: #{tpu_custom_call.1} parent=1 // pred_check_branch
      %215 = sbr.rel (0) target = $region29
    $region28: #{tpu_custom_call.1} parent=1 // pred_region
      %s217 = ssub.s32 128, 128
      %218 = vsyncadd [#allocation4], %s217
      %s220 = sshll.u32 [#allocation5], 4
      %s221 = int_to_ptr.vmem [resolvable:$true] %s220
      %223 = dma.vmem_to_hbm [thread:$0]  %s221, 128, %s5, [#allocation4]
    $region29: #{tpu_custom_call.1} parent=1 // pred_fallthru
      _
    // Predicated region
    $region30: #{tpu_custom_call.1} parent=1 // pred_check
      _
    $region31: #{tpu_custom_call.1} parent=1 // pred_check_branch
      %225 = sbr.rel (0) target = $region33
    $region32: #{tpu_custom_call.1} parent=1 // pred_region
      %226 = dma.done [#allocation4], 128
    $region33: #{tpu_custom_call.1} parent=1 // pred_fallthru
      _
    %227 = vsyncpa [#allocation3], 1
    %228 = vsyncpa [#allocation4], 1

</llo_original>
